<compile_context>
chip_gen: v7x
topology: tpu7x:2x2x1
jax: 0.10.0
libtpu: 0.0.40
codegen_flags: <defaults>
</compile_context>

<pallas_src>
import jax
import jax.numpy as jnp
from jax import lax
from jax.experimental import pallas as pl
from jax.experimental.pallas import tpu as pltpu

ALPHA = 0.2  # LeakyReLU negative_slope


# ----------------------------------------------------------------------------
# Pallas kernel: SharedMLP (two 1x1 conv layers with eval-mode BN folded into
# weight/bias) + max-pool over nsample.  One grid step == (one npoint tile,
# one batch element).
# ----------------------------------------------------------------------------
def _make_sa_kernel(nsample, tp, alpha):
    def kernel(g_ref, w1_ref, b1_ref, w2_ref, b2_ref, o_ref):
        x = g_ref[0]                                    # (C0, S*TP) bf16, lane-dense

        # layer 1: folded conv+BN, bias, LeakyReLU.  MXU N = S*TP >= 1024.
        h = jnp.dot(w1_ref[...], x, preferred_element_type=jnp.float32)   # (C1, S*TP)
        h = h + b1_ref[...]                             # (C1,1) broadcast over lanes
        h = jnp.maximum(h, alpha * h)

        # layer 2: folded conv+BN (bias/activation deferred past the pool)
        h = jnp.dot(w2_ref[...], h.astype(jnp.bfloat16),
                    preferred_element_type=jnp.float32)                   # (C2, S*TP)

        # max-pool over nsample: unrolled VPU max over lane-aligned (C2, TP)
        # slices (columns are s-major: s*TP + p_local).
        pooled = h[:, :tp]
        for s in range(1, nsample):
            pooled = jnp.maximum(pooled, h[:, s * tp:(s + 1) * tp])        # (C2, TP)

        # per-channel bias + LeakyReLU commute with the max (monotone), so do
        # them on the pooled (C2, TP) tile: S-fold less elementwise work.
        pooled = pooled + b2_ref[...]
        pooled = jnp.maximum(pooled, alpha * pooled)

        o_ref[0] = pooled.astype(o_ref.dtype)           # lane-dense (C2, TP) store

    return kernel


def _pick_tile_and_vmem(p_pad, S, c0, c1, c2):
    """Generation-aware npoint-tile size and vmem limit."""
    try:
        info = pltpu.get_tpu_info()
        vmem_phys = int(getattr(info, "vmem_capacity_bytes", 64 * 1024 * 1024))
    except Exception:
        vmem_phys = 64 * 1024 * 1024
    if vmem_phys <= 64 * 1024 * 1024:          # v7x-class: 64 MiB physical VMEM
        vmem_limit = 40 * 1024 * 1024
    else:                                      # v5e / v6e: 128 MiB physical VMEM
        vmem_limit = 96 * 1024 * 1024
    budget = (vmem_limit * 3) // 5             # leave room for Mosaic scratch/spill

    tp = 128
    for cand in (512, 256, 128):
        if p_pad % cand:
            continue
        per_step = (2 * c0 * S * cand * 2                 # bf16 input, double-buffered
                    + (c1 * 4 + c1 * 2 + c2 * 4) * S * cand   # f32/bf16 intermediates
                    + 2 * c2 * cand * 4)                  # f32 output, double-buffered
        if per_step <= budget:
            tp = cand
            break
    return tp, vmem_limit


def sa_mlp_pool(grouped, w1t, b1, w2t, b2):
    """grouped: (B, C0, S, P) bf16 channels-first -> (B, C2, P) f32."""
    B, C0, S, P = grouped.shape
    C1 = w1t.shape[0]
    C2 = w2t.shape[0]

    # Pad npoint to a multiple of 128: keeps the point axis lane-dense
    # (unmasked 128-wide stores) and the per-step block bounded.
    P_pad = max(128, ((P + 127) // 128) * 128)
    if P_pad != P:
        grouped = jnp.pad(grouped, ((0, 0), (0, 0), (0, 0), (0, P_pad - P)))

    TP, vmem_limit = _pick_tile_and_vmem(P_pad, S, C0, C1, C2)
    n_tiles = P_pad // TP

    # Re-pack so each npoint tile is one contiguous, s-major, lane-dense slab:
    # column index inside a tile is s*TP + p_local (layout plumbing in bf16).
    g = grouped.reshape(B, C0, S, n_tiles, TP)
    g = jnp.transpose(g, (0, 1, 3, 2, 4)).reshape(B, C0, n_tiles * S * TP)

    kernel = _make_sa_kernel(S, TP, ALPHA)
    out = pl.pallas_call(
        kernel,
        out_shape=jax.ShapeDtypeStruct((B, C2, P_pad), jnp.float32),
        grid_spec=pltpu.PrefetchScalarGridSpec(
            num_scalar_prefetch=0,
            # P-tile axis first so the product of parallel extents splits
            # across both v7x TensorCores even at small batch.
            grid=(n_tiles, B),
            in_specs=[
                pl.BlockSpec((1, C0, S * TP), lambda pt, b: (b, 0, pt)),
                pl.BlockSpec((C1, C0), lambda pt, b: (0, 0)),
                pl.BlockSpec((C1, 1), lambda pt, b: (0, 0)),
                pl.BlockSpec((C2, C1), lambda pt, b: (0, 0)),
                pl.BlockSpec((C2, 1), lambda pt, b: (0, 0)),
            ],
            out_specs=pl.BlockSpec((1, C2, TP), lambda pt, b: (b, 0, pt)),
        ),
        compiler_params=pltpu.CompilerParams(
            dimension_semantics=("parallel", "parallel"),
            vmem_limit_bytes=int(vmem_limit)),
    )(g, w1t, b1.reshape(C1, 1), w2t, b2.reshape(C2, 1))
    return out[:, :, :P]


# ----------------------------------------------------------------------------
# Parameter folding: eval-mode BatchNorm (scale AND shift) into the 1x1 conv.
# ----------------------------------------------------------------------------
def fold_conv_bn(w, gamma, beta, mean, var, conv_bias=None, eps=1e-5):
    """w: (C_in, C_out).  Returns (w_t bf16 (C_out, C_in), bias f32 (C_out,))."""
    scale = gamma / jnp.sqrt(var + eps)                         # (C_out,)
    if conv_bias is None:
        conv_bias = jnp.zeros_like(gamma)
    w_t = jnp.transpose(w * scale[None, :]).astype(jnp.bfloat16)   # (C_out, C_in)
    bias = ((conv_bias - mean) * scale + beta).astype(jnp.float32)
    return w_t, bias


# ----------------------------------------------------------------------------
# Plain-JAX glue: furthest point sampling, ball query, grouping.
# TODO(synk): for realistic N the O(B*P*N) distance matrix / sort here will
# dominate wall clock; it should eventually move into its own Pallas kernel.
# ----------------------------------------------------------------------------
def furthest_point_sample(xyz, npoint):
    """xyz: (B, N, 3) -> (B, npoint) int32 indices (starts at point 0)."""
    B, N, _ = xyz.shape

    def body(i, state):
        idxs, dists, farthest = state
        idxs = idxs.at[:, i].set(farthest)
        centroid = jnp.take_along_axis(xyz, farthest[:, None, None], axis=1)
        d = jnp.sum((xyz - centroid) ** 2, axis=-1)
        dists = jnp.minimum(dists, d)
        farthest = jnp.argmax(dists, axis=-1).astype(jnp.int32)
        return idxs, dists, farthest

    idxs0 = jnp.zeros((B, npoint), jnp.int32)
    dists0 = jnp.full((B, N), 1e10, jnp.float32)
    far0 = jnp.zeros((B,), jnp.int32)
    idxs, _, _ = lax.fori_loop(0, npoint, body, (idxs0, dists0, far0))
    return idxs


def ball_query(radius, nsample, xyz, new_xyz):
    """First-nsample-in-radius indices, padded with the first hit (CUDA semantics).
    Empty neighborhoods fall back to index 0."""
    B, N, _ = xyz.shape
    d2 = jnp.sum((new_xyz[:, :, None, :] - xyz[:, None, :, :]) ** 2, axis=-1)
    in_ball = d2 < radius * radius
    key = jnp.where(in_ball, jnp.arange(N)[None, None, :], N)
    order = jnp.sort(key, axis=-1)[:, :, :nsample]          # (B, P, S)
    first = order[:, :, :1]
    idx = jnp.where(order >= N, first, order)                # pad with first hit
    idx = jnp.where(idx >= N, 0, idx)                        # empty ball -> index 0
    return idx.astype(jnp.int32)


def query_and_group(radius, nsample, xyz, new_xyz, features):
    """Returns channels-FIRST grouped tensor (B, 3 + C, S, P) in bf16 (use_xyz=True).
    bf16 happens at gather time so the S-times-inflated tensor is bf16 in HBM."""
    B, N, _ = xyz.shape
    P = new_xyz.shape[1]
    idx = ball_query(radius, nsample, xyz, new_xyz)              # (B, P, S)
    idx_t = jnp.transpose(idx, (0, 2, 1))                        # (B, S, P)
    flat = idx_t.reshape(B, 1, nsample * P)

    xyz_t = jnp.transpose(xyz, (0, 2, 1))                        # (B, 3, N) f32
    gx = jnp.take_along_axis(xyz_t, jnp.broadcast_to(flat, (B, 3, nsample * P)), axis=2)
    gx = gx.reshape(B, 3, nsample, P)
    gx = (gx - jnp.transpose(new_xyz, (0, 2, 1))[:, :, None, :]).astype(jnp.bfloat16)

    if features is not None:
        C = features.shape[-1]
        ft = jnp.transpose(features, (0, 2, 1)).astype(jnp.bfloat16)  # (B, C, N) bf16
        gf = jnp.take_along_axis(ft, jnp.broadcast_to(flat, (B, C, nsample * P)), axis=2)
        gf = gf.reshape(B, C, nsample, P)
        return jnp.concatenate([gx, gf], axis=1)                 # (B, 3+C, S, P) bf16
    return gx


def pointnet_sa_forward(xyz, features, npoint, radius, nsample,
                        w1, bn1, w2, bn2, eps=1e-5):
    """xyz: (B, N, 3), features: (B, N, C); bn = (gamma, beta, running_mean,
    running_var).  Returns (new_xyz (B, npoint, 3), new_features (B, C2, npoint))."""
    B = xyz.shape[0]
    w1t, b1 = fold_conv_bn(w1, *bn1, eps=eps)
    w2t, b2 = fold_conv_bn(w2, *bn2, eps=eps)

    fps_idx = furthest_point_sample(xyz, npoint)                        # (B, P)
    new_xyz = xyz[jnp.arange(B)[:, None], fps_idx]                      # (B, P, 3)
    grouped = query_and_group(radius, nsample, xyz, new_xyz, features)  # (B, C0, S, P) bf16
    new_features = sa_mlp_pool(grouped, w1t, b1, w2t, b2)               # (B, C2, P) f32
    return new_xyz, new_features


# ----------------------------------------------------------------------------
def _reference(grouped_cf, w1t, b1, w2t, b2, alpha=ALPHA):
    """Plain-JAX reference with the same bf16 quantization as the kernel.
    grouped_cf: (B, C0, S, P) bf16; weights pre-folded/transposed."""
    h = jnp.einsum('dc,bcsp->bdsp', w1t, grouped_cf,
                   preferred_element_type=jnp.float32) + b1[None, :, None, None]
    h = jnp.maximum(h, alpha * h)
    h = jnp.einsum('ed,bdsp->besp', w2t, h.astype(jnp.bfloat16),
                   preferred_element_type=jnp.float32) + b2[None, :, None, None]
    h = jnp.maximum(h, alpha * h)
    return jnp.max(h, axis=2)                                           # (B, C2, P)


if __name__ == "__main__":
    key = jax.random.PRNGKey(0)
    ks = jax.random.split(key, 12)

    B, N, C_feat = 2, 16, 4
    npoint, nsample, radius = 8, 8, 0.8
    # mlp = [4, 16, 32]; use_xyz=True -> first layer input is 4 + 3 = 7
    C0, C1, C2 = C_feat + 3, 16, 32

    xyz = jax.random.uniform(ks[0], (B, N, 3), jnp.float32)
    features = jax.random.normal(ks[1], (B, N, C_feat), jnp.float32)

    # deterministic synthetic parameters (1x1 conv weights + eval-mode BN with
    # nonzero running_mean / non-unit running_var to exercise the full fold)
    w1 = 0.1 * jax.random.normal(ks[2], (C0, C1), jnp.float32)
    w2 = 0.1 * jax.random.normal(ks[3], (C1, C2), jnp.float32)
    g1 = 1.0 + 0.05 * jax.random.normal(ks[4], (C1,), jnp.float32)
    bt1 = 0.05 * jax.random.normal(ks[5], (C1,), jnp.float32)
    m1 = 0.1 * jax.random.normal(ks[6], (C1,), jnp.float32)
    v1 = 1.0 + 0.1 * jax.random.uniform(ks[7], (C1,), jnp.float32)
    g2 = 1.0 + 0.05 * jax.random.normal(ks[8], (C2,), jnp.float32)
    bt2 = 0.05 * jax.random.normal(ks[9], (C2,), jnp.float32)
    m2 = 0.1 * jax.random.normal(ks[10], (C2,), jnp.float32)
    v2 = 1.0 + 0.1 * jax.random.uniform(ks[11], (C2,), jnp.float32)

    fwd = jax.jit(pointnet_sa_forward,
                  static_argnames=("npoint", "radius", "nsample"))
    new_xyz, new_features = fwd(xyz, features, npoint=npoint, radius=radius,
                                nsample=nsample, w1=w1, bn1=(g1, bt1, m1, v1),
                                w2=w2, bn2=(g2, bt2, m2, v2))
    jax.block_until_ready((new_xyz, new_features))

    # sanity check against a plain-JAX reference of the Pallas-covered part
    grouped = query_and_group(radius, nsample, xyz, new_xyz, features)
    w1t, b1 = fold_conv_bn(w1, g1, bt1, m1, v1)
    w2t, b2 = fold_conv_bn(w2, g2, bt2, m2, v2)
    ref = _reference(grouped, w1t, b1, w2t, b2)

    assert new_xyz.shape == (B, npoint, 3)
    assert new_features.shape == (B, C2, npoint)
    assert jnp.allclose(new_features, ref, rtol=5e-3, atol=5e-3)

    print("KERNEL_OK")
</pallas_src>

<mosaic_0001>
module attributes {stable_mosaic.version = 11 : i64} {
  func.func @kernel(%arg0: i32, %arg1: i32, %arg2: memref<1x7x1024xbf16, #tpu.memory_space<vmem>>, %arg3: memref<16x7xbf16, #tpu.memory_space<vmem>>, %arg4: memref<16x1xf32, #tpu.memory_space<vmem>>, %arg5: memref<32x16xbf16, #tpu.memory_space<vmem>>, %arg6: memref<32x1xf32, #tpu.memory_space<vmem>>, %arg7: memref<1x32x128xf32, #tpu.memory_space<vmem>>) attributes {dimension_semantics = [#tpu.dimension_semantics<parallel>, #tpu.dimension_semantics<parallel>], iteration_bounds = array<i64: 1, 2>, scalar_prefetch = 0 : i64, scratch_operands = 0 : i64, tpu.core_type = #tpu.core_type<tc>, window_params = [{transform_indices = @transform_0, window_bounds = array<i64: 1, 7, 1024>}, {pipeline_mode = #tpu.pipeline_mode<synchronous>, transform_indices = @transform_1, window_bounds = array<i64: 16, 7>}, {pipeline_mode = #tpu.pipeline_mode<synchronous>, transform_indices = @transform_2, window_bounds = array<i64: 16, 1>}, {pipeline_mode = #tpu.pipeline_mode<synchronous>, transform_indices = @transform_3, window_bounds = array<i64: 32, 16>}, {pipeline_mode = #tpu.pipeline_mode<synchronous>, transform_indices = @transform_4, window_bounds = array<i64: 32, 1>}, {transform_indices = @transform_5, window_bounds = array<i64: 1, 32, 128>}]} {
    %c0 = arith.constant 0 : index
    %c0_0 = arith.constant 0 : index
    %c0_1 = arith.constant 0 : index
    %0 = vector.load %arg2[%c0, %c0_0, %c0_1] : memref<1x7x1024xbf16, #tpu.memory_space<vmem>>, vector<1x7x1024xbf16>
    %1 = vector.shape_cast %0 : vector<1x7x1024xbf16> to vector<7x1024xbf16>
    %c0_2 = arith.constant 0 : index
    %c0_3 = arith.constant 0 : index
    %2 = vector.load %arg3[%c0_2, %c0_3] : memref<16x7xbf16, #tpu.memory_space<vmem>>, vector<16x7xbf16>
    %cst = arith.constant dense<0.000000e+00> : vector<16x1024xf32>
    %3 = tpu.matmul %2, %1, %cst {dimension_numbers = #tpu.dot_dimension_numbers<[1], [0], [0], [1], [0, 0, 1, 1], [], []>} : vector<16x7xbf16>, vector<7x1024xbf16>, vector<16x1024xf32> -> vector<16x1024xf32>
    %c0_4 = arith.constant 0 : index
    %c0_5 = arith.constant 0 : index
    %4 = vector.load %arg4[%c0_4, %c0_5] : memref<16x1xf32, #tpu.memory_space<vmem>>, vector<16x1xf32>
    %5 = vector.broadcast %4 : vector<16x1xf32> to vector<16x1024xf32>
    %6 = arith.addf %3, %5 : vector<16x1024xf32>
    %cst_6 = arith.constant 2.000000e-01 : f32
    %7 = vector.broadcast %cst_6 : f32 to vector<16x1024xf32>
    %8 = arith.mulf %7, %6 : vector<16x1024xf32>
    %9 = arith.maximumf %6, %8 : vector<16x1024xf32>
    %c0_7 = arith.constant 0 : index
    %c0_8 = arith.constant 0 : index
    %10 = vector.load %arg5[%c0_7, %c0_8] : memref<32x16xbf16, #tpu.memory_space<vmem>>, vector<32x16xbf16>
    %11 = arith.truncf %9 : vector<16x1024xf32> to vector<16x1024xbf16>
    %cst_9 = arith.constant dense<0.000000e+00> : vector<32x1024xf32>
    %12 = tpu.matmul %10, %11, %cst_9 {dimension_numbers = #tpu.dot_dimension_numbers<[1], [0], [0], [1], [0, 0, 1, 1], [], []>} : vector<32x16xbf16>, vector<16x1024xbf16>, vector<32x1024xf32> -> vector<32x1024xf32>
    %13 = vector.extract_strided_slice %12 {offsets = [0, 0], sizes = [32, 128], strides = [1, 1]} : vector<32x1024xf32> to vector<32x128xf32>
    %14 = vector.extract_strided_slice %12 {offsets = [0, 128], sizes = [32, 128], strides = [1, 1]} : vector<32x1024xf32> to vector<32x128xf32>
    %15 = arith.maximumf %13, %14 : vector<32x128xf32>
    %16 = vector.extract_strided_slice %12 {offsets = [0, 256], sizes = [32, 128], strides = [1, 1]} : vector<32x1024xf32> to vector<32x128xf32>
    %17 = arith.maximumf %15, %16 : vector<32x128xf32>
    %18 = vector.extract_strided_slice %12 {offsets = [0, 384], sizes = [32, 128], strides = [1, 1]} : vector<32x1024xf32> to vector<32x128xf32>
    %19 = arith.maximumf %17, %18 : vector<32x128xf32>
    %20 = vector.extract_strided_slice %12 {offsets = [0, 512], sizes = [32, 128], strides = [1, 1]} : vector<32x1024xf32> to vector<32x128xf32>
    %21 = arith.maximumf %19, %20 : vector<32x128xf32>
    %22 = vector.extract_strided_slice %12 {offsets = [0, 640], sizes = [32, 128], strides = [1, 1]} : vector<32x1024xf32> to vector<32x128xf32>
    %23 = arith.maximumf %21, %22 : vector<32x128xf32>
    %24 = vector.extract_strided_slice %12 {offsets = [0, 768], sizes = [32, 128], strides = [1, 1]} : vector<32x1024xf32> to vector<32x128xf32>
    %25 = arith.maximumf %23, %24 : vector<32x128xf32>
    %26 = vector.extract_strided_slice %12 {offsets = [0, 896], sizes = [32, 128], strides = [1, 1]} : vector<32x1024xf32> to vector<32x128xf32>
    %27 = arith.maximumf %25, %26 : vector<32x128xf32>
    %c0_10 = arith.constant 0 : index
    %c0_11 = arith.constant 0 : index
    %28 = vector.load %arg6[%c0_10, %c0_11] : memref<32x1xf32, #tpu.memory_space<vmem>>, vector<32x1xf32>
    %29 = vector.broadcast %28 : vector<32x1xf32> to vector<32x128xf32>
    %30 = arith.addf %27, %29 : vector<32x128xf32>
    %cst_12 = arith.constant 2.000000e-01 : f32
    %31 = vector.broadcast %cst_12 : f32 to vector<32x128xf32>
    %32 = arith.mulf %31, %30 : vector<32x128xf32>
    %33 = arith.maximumf %30, %32 : vector<32x128xf32>
    %c0_13 = arith.constant 0 : index
    %c0_14 = arith.constant 0 : index
    %c0_15 = arith.constant 0 : index
    %34 = vector.load %arg7[%c0_13, %c0_14, %c0_15] : memref<1x32x128xf32, #tpu.memory_space<vmem>>, vector<1x32x128xf32>
    %35 = vector.shape_cast %34 : vector<1x32x128xf32> to vector<32x128xf32>
    %36 = vector.shape_cast %33 : vector<32x128xf32> to vector<1x32x128xf32>
    tpu.vector_store %arg7[%c0_13, %c0_14, %c0_15], %36 {strides = array<i32>} : memref<1x32x128xf32, #tpu.memory_space<vmem>>, vector<1x32x128xf32>,
    return
  }
  func.func @transform_0(%arg0: i32, %arg1: i32) -> (i32, i32, i32) {
    %c0_i32 = arith.constant 0 : i32
    %c0_i32_0 = arith.constant 0 : i32
    return %arg1, %c0_i32, %arg0 : i32, i32, i32
  }
  func.func @transform_1(%arg0: i32, %arg1: i32) -> (i32, i32) {
    %c0_i32 = arith.constant 0 : i32
    %c0_i32_0 = arith.constant 0 : i32
    %c0_i32_1 = arith.constant 0 : i32
    return %c0_i32, %c0_i32_0 : i32, i32
  }
  func.func @transform_2(%arg0: i32, %arg1: i32) -> (i32, i32) {
    %c0_i32 = arith.constant 0 : i32
    %c0_i32_0 = arith.constant 0 : i32
    %c0_i32_1 = arith.constant 0 : i32
    return %c0_i32, %c0_i32_0 : i32, i32
  }
  func.func @transform_3(%arg0: i32, %arg1: i32) -> (i32, i32) {
    %c0_i32 = arith.constant 0 : i32
    %c0_i32_0 = arith.constant 0 : i32
    %c0_i32_1 = arith.constant 0 : i32
    return %c0_i32, %c0_i32_0 : i32, i32
  }
  func.func @transform_4(%arg0: i32, %arg1: i32) -> (i32, i32) {
    %c0_i32 = arith.constant 0 : i32
    %c0_i32_0 = arith.constant 0 : i32
    %c0_i32_1 = arith.constant 0 : i32
    return %c0_i32, %c0_i32_0 : i32, i32
  }
  func.func @transform_5(%arg0: i32, %arg1: i32) -> (i32, i32, i32) {
    %c0_i32 = arith.constant 0 : i32
    %c0_i32_0 = arith.constant 0 : i32
    return %arg1, %c0_i32, %arg0 : i32, i32, i32
  }
}

</mosaic_0001>

<llo_original>
// kernel: custom-call.8
$region0: #{custom-call.8}
  %s0 = inlined_call_operand.vmem [shape: f32[2,16], index: 0, kind: output, shape index: {}]

// kernel: pointnet_sa_forward.1
$region0: #{pointnet_sa_forward.1}
  #allocation0 [shape = 'u32[]', space=smem, size = 0x4, offset = 0x4, fixed_abs, tag = 'smem constant byte address 0x4 - core index']
  #allocation1 [shape = 'u32[144,128]{1,0:T(1,128)}', space=vmem, size = 0x12000, scoped, tag = 'internal scratch']
  %s0 = inlined_call_operand.vmem [shape: bf16[2,7,1024], index: 0, kind: input, shape index: {}]
  %s1 = inlined_call_operand.vmem [shape: bf16[16,7], index: 1, kind: input, shape index: {}]
  %s2 = inlined_call_operand.vmem [shape: f32[16,1], index: 2, kind: input, shape index: {}]
  %s3 = inlined_call_operand.vmem [shape: bf16[32,16], index: 3, kind: input, shape index: {}]
  %s4 = inlined_call_operand.vmem [shape: f32[32,1], index: 4, kind: input, shape index: {}]
  %s5 = inlined_call_operand.vmem [shape: f32[2,32,128], index: 5, kind: output, shape index: {}]
  %s6 = sld [smem:[#allocation0]]
  $region53: #{pointnet_sa_forward.1} parent=0
    _
  %s8 = ssub.s32 1, %s6
  %s9 = scalar_select 0, %s8, %s6
  loop: start=0, step=1, limit=4
  $region2: #{pointnet_sa_forward.1} parent=0 // loop_pre_header
    _
  $region3: #{pointnet_sa_forward.1} parent=0 // loop_header
    %s11 = sphi 0, %s15
    %p12 = scmp.ge.s32.totalorder %s11, 4
    %s18 = sphi 0, %s30
    %s19 = sphi 0, %s26
    %s20 = sphi 0, %s18
    %s21 = sphi 0, %s19
    %s22 = sphi 0, %s20
    %s23 = sphi 0, %s21
    %s35 = sphi 0, %s37
    %s38 = sphi 0, %s35
    %s39 = sphi 0, %s38
    %s55 = sphi 0, %s39
    %s59 = sphi 0, %s59
    %s61 = sphi 0, %s59
    %s62 = sphi 0, %s61
    %s76 = sphi 0, %s62
    %s80 = sphi 0, %s80
    %s82 = sphi 0, %s80
    %s83 = sphi 0, %s82
    %s97 = sphi 0, %s83
    %s101 = sphi 0, %s101
    %s103 = sphi 0, %s101
    %s104 = sphi 0, %s103
    %s118 = sphi 0, %s104
    %s122 = sphi 0, %s122
    %s124 = sphi 0, %s122
    %s125 = sphi 0, %s124
    %s139 = sphi 0, %s125
    %s147 = sphi 0, %s149
    %s150 = sphi 0, %s147
    %s151 = sphi 0, %s150
    %s167 = sphi 0, %s151
  $region4: #{pointnet_sa_forward.1} parent=0 // loop_header_branch
    %14 = sbr.rel (%p12) target = $region8
  $region5: #{pointnet_sa_forward.1} parent=0 // loop_body
    %s16 = ssub.s32 %s11, 1
    %s17 = ssub.s32 %s11, 2
    %s24 = sadd.s32 1, %s19
    %p25 = scmp.ge.s32.totalorder %s24, 2
    %s26 = scalar_select %p25, 0, %s24
    %s27 = sadd.s32 1, %s18
    %s28 = scalar_select %p25, %s27, %s18
    %p29 = scmp.ge.s32.totalorder %s28, 1
    %s30 = scalar_select %p29, 0, %s28
    %s31 = ssub.s32 %s19, %s26
    %s32 = ssub.s32 %s18, %s30
    %s33 = sor.u32 %s31, %s32
    %p34 = scmp.eq.s32.totalorder %s33, 0
    %s36 = sadd.s32 %s35, 1
    %s37 = scalar_select %p34, %s35, %s36
    %p40 = pneg %p34
    %p41 = scmp.eq.s32.totalorder %s11, 1
    %p42 = por %p40, %p41
    %p43 = scmp.ne.s32.totalorder %s35, %s38
    %p44 = scmp.eq.s32.totalorder %s11, 0
    %p45 = por %p43, %p44
    %p46 = scmp.ne.s32.totalorder %s35, %s38
    %p47 = scmp.eq.s32.totalorder %s16, 1
    %p48 = por %p46, %p47
    %p49 = scmp.ne.s32.totalorder %s38, %s39
    %p50 = scmp.eq.s32.totalorder %s16, 0
    %p51 = por %p49, %p50
    %p52 = scmp.ne.s32.totalorder %s38, %s39
    %p53 = scmp.eq.s32.totalorder %s17, 1
    %p54 = por %p52, %p53
    %p56 = scmp.ne.s32.totalorder %s39, %s55
    %p57 = scmp.eq.s32.totalorder %s17, 0
    %p58 = por %p56, %p57
    %s60 = sadd.s32 %s59, 1
    %p63 = scmp.eq.s32.totalorder %s11, 1
    %p64 = scmp.ne.s32.totalorder %s59, %s61
    %p65 = scmp.eq.s32.totalorder %s11, 0
    %p66 = por %p64, %p65
    %p67 = scmp.ne.s32.totalorder %s59, %s61
    %p68 = scmp.eq.s32.totalorder %s16, 1
    %p69 = por %p67, %p68
    %p70 = scmp.ne.s32.totalorder %s61, %s62
    %p71 = scmp.eq.s32.totalorder %s16, 0
    %p72 = por %p70, %p71
    %p73 = scmp.ne.s32.totalorder %s61, %s62
    %p74 = scmp.eq.s32.totalorder %s17, 1
    %p75 = por %p73, %p74
    %p77 = scmp.ne.s32.totalorder %s62, %s76
    %p78 = scmp.eq.s32.totalorder %s17, 0
    %p79 = por %p77, %p78
    %s81 = sadd.s32 %s80, 1
    %p84 = scmp.eq.s32.totalorder %s11, 1
    %p85 = scmp.ne.s32.totalorder %s80, %s82
    %p86 = scmp.eq.s32.totalorder %s11, 0
    %p87 = por %p85, %p86
    %p88 = scmp.ne.s32.totalorder %s80, %s82
    %p89 = scmp.eq.s32.totalorder %s16, 1
    %p90 = por %p88, %p89
    %p91 = scmp.ne.s32.totalorder %s82, %s83
    %p92 = scmp.eq.s32.totalorder %s16, 0
    %p93 = por %p91, %p92
    %p94 = scmp.ne.s32.totalorder %s82, %s83
    %p95 = scmp.eq.s32.totalorder %s17, 1
    %p96 = por %p94, %p95
    %p98 = scmp.ne.s32.totalorder %s83, %s97
    %p99 = scmp.eq.s32.totalorder %s17, 0
    %p100 = por %p98, %p99
    %s102 = sadd.s32 %s101, 1
    %p105 = scmp.eq.s32.totalorder %s11, 1
    %p106 = scmp.ne.s32.totalorder %s101, %s103
    %p107 = scmp.eq.s32.totalorder %s11, 0
    %p108 = por %p106, %p107
    %p109 = scmp.ne.s32.totalorder %s101, %s103
    %p110 = scmp.eq.s32.totalorder %s16, 1
    %p111 = por %p109, %p110
    %p112 = scmp.ne.s32.totalorder %s103, %s104
    %p113 = scmp.eq.s32.totalorder %s16, 0
    %p114 = por %p112, %p113
    %p115 = scmp.ne.s32.totalorder %s103, %s104
    %p116 = scmp.eq.s32.totalorder %s17, 1
    %p117 = por %p115, %p116
    %p119 = scmp.ne.s32.totalorder %s104, %s118
    %p120 = scmp.eq.s32.totalorder %s17, 0
    %p121 = por %p119, %p120
    %s123 = sadd.s32 %s122, 1
    %p126 = scmp.eq.s32.totalorder %s11, 1
    %p127 = scmp.ne.s32.totalorder %s122, %s124
    %p128 = scmp.eq.s32.totalorder %s11, 0
    %p129 = por %p127, %p128
    %p130 = scmp.ne.s32.totalorder %s122, %s124
    %p131 = scmp.eq.s32.totalorder %s16, 1
    %p132 = por %p130, %p131
    %p133 = scmp.ne.s32.totalorder %s124, %s125
    %p134 = scmp.eq.s32.totalorder %s16, 0
    %p135 = por %p133, %p134
    %p136 = scmp.ne.s32.totalorder %s124, %s125
    %p137 = scmp.eq.s32.totalorder %s17, 1
    %p138 = por %p136, %p137
    %p140 = scmp.ne.s32.totalorder %s125, %s139
    %p141 = scmp.eq.s32.totalorder %s17, 0
    %p142 = por %p140, %p141
    %s143 = ssub.s32 %s19, %s26
    %s144 = ssub.s32 %s18, %s30
    %s145 = sor.u32 %s143, %s144
    %p146 = scmp.eq.s32.totalorder %s145, 0
    %s148 = sadd.s32 %s147, 1
    %s149 = scalar_select %p146, %s147, %s148
    %p152 = pneg %p146
    %p153 = scmp.eq.s32.totalorder %s11, 1
    %p154 = por %p152, %p153
    %p155 = scmp.ne.s32.totalorder %s147, %s150
    %p156 = scmp.eq.s32.totalorder %s11, 0
    %p157 = por %p155, %p156
    %p158 = scmp.ne.s32.totalorder %s147, %s150
    %p159 = scmp.eq.s32.totalorder %s16, 1
    %p160 = por %p158, %p159
    %p161 = scmp.ne.s32.totalorder %s150, %s151
    %p162 = scmp.eq.s32.totalorder %s16, 0
    %p163 = por %p161, %p162
    %p164 = scmp.ne.s32.totalorder %s150, %s151
    %p165 = scmp.eq.s32.totalorder %s17, 1
    %p166 = por %p164, %p165
    %p168 = scmp.ne.s32.totalorder %s151, %s167
    %p169 = scmp.eq.s32.totalorder %s17, 0
    %p170 = por %p168, %p169
    %p171 = scmp.le.s32.totalorder 1, %s11
    %p172 = scmp.lt.s32.totalorder %s11, 3
    %p173 = pnand %p171, %p172
    %p174 = pneg %p173
    // Predicated region
    $region9: #{pointnet_sa_forward.1} parent=5 // pred_check
      _
    $region10: #{pointnet_sa_forward.1} parent=5 // pred_check_branch
      %176 = sbr.rel (%p173) target = $region12
    $region11: #{pointnet_sa_forward.1} parent=5 // pred_region
      %s177 = ssub.s32 %s11, 1
      // Predicated region
      $region13: #{pointnet_sa_forward.1} parent=11 // pred_check
        %p178 = pneg %p72
      $region14: #{pointnet_sa_forward.1} parent=11 // pred_check_branch
        %180 = sbr.rel (%p178) target = $region16
      $region15: #{pointnet_sa_forward.1} parent=11 // pred_region
        _
      $region16: #{pointnet_sa_forward.1} parent=11 // pred_fallthru
        _
      // Predicated region
      $region17: #{pointnet_sa_forward.1} parent=11 // pred_check
        %p181 = pneg %p93
      $region18: #{pointnet_sa_forward.1} parent=11 // pred_check_branch
        %183 = sbr.rel (%p181) target = $region20
      $region19: #{pointnet_sa_forward.1} parent=11 // pred_region
        _
      $region20: #{pointnet_sa_forward.1} parent=11 // pred_fallthru
        _
      // Predicated region
      $region21: #{pointnet_sa_forward.1} parent=11 // pred_check
        %p184 = pneg %p114
      $region22: #{pointnet_sa_forward.1} parent=11 // pred_check_branch
        %186 = sbr.rel (%p184) target = $region24
      $region23: #{pointnet_sa_forward.1} parent=11 // pred_region
        _
      $region24: #{pointnet_sa_forward.1} parent=11 // pred_fallthru
        _
      // Predicated region
      $region25: #{pointnet_sa_forward.1} parent=11 // pred_check
        %p187 = pneg %p135
      $region26: #{pointnet_sa_forward.1} parent=11 // pred_check_branch
        %189 = sbr.rel (%p187) target = $region28
      $region27: #{pointnet_sa_forward.1} parent=11 // pred_region
        _
      $region28: #{pointnet_sa_forward.1} parent=11 // pred_fallthru
        _
    $region12: #{pointnet_sa_forward.1} parent=5 // pred_fallthru
      _
    %p190 = scmp.lt.s32.totalorder %s11, 2
    // Predicated region
    $region29: #{pointnet_sa_forward.1} parent=5 // pred_check
      %p191 = pneg %p190
    $region30: #{pointnet_sa_forward.1} parent=5 // pred_check_branch
      %193 = sbr.rel (%p191) target = $region32
    $region31: #{pointnet_sa_forward.1} parent=5 // pred_region
      // Predicated region
      $region33: #{pointnet_sa_forward.1} parent=31 // pred_check
        %p194 = pneg %p45
      $region34: #{pointnet_sa_forward.1} parent=31 // pred_check_branch
        %196 = sbr.rel (%p194) target = $region36
      $region35: #{pointnet_sa_forward.1} parent=31 // pred_region
        %s197 = smul.u32 8, %s18
        %p198 = scmp.lt.s32.totalorder %s19, 1
        %s199 = scalar_select %p198, %s19, 1
        %p200 = scmp.lt.s32.totalorder %s197, 7
        %s201 = scalar_select %p200, %s197, 7
        %s202 = smul.addr %s199, 8
        %s203 = sadd.s32 %s201, %s202
        %s204 = smul.addr %s203, 4
        %s205 = scalar_lea.vmem %s0, %s204
        %s206 = smul.u32 8, %s18
      $region36: #{pointnet_sa_forward.1} parent=31 // pred_fallthru
        _
    $region32: #{pointnet_sa_forward.1} parent=5 // pred_fallthru
      _
    %p207 = scmp.le.s32.totalorder 1, %s11
    %p208 = scmp.lt.s32.totalorder %s11, 3
    %p209 = pnand %p207, %p208
    %p210 = pneg %p209
    // Predicated region
    $region37: #{pointnet_sa_forward.1} parent=5 // pred_check
      _
    $region38: #{pointnet_sa_forward.1} parent=5 // pred_check_branch
      %212 = sbr.rel (%p209) target = $region40
    $region39: #{pointnet_sa_forward.1} parent=5 // pred_region
      %s213 = ssub.s32 %s11, 1
      %s214 = smul.u32 8, %s20
      %p215 = scmp.lt.s32.totalorder %s21, 1
      %s216 = scalar_select %p215, %s21, 1
      %p217 = scmp.lt.s32.totalorder %s214, 7
      %s218 = scalar_select %p217, %s214, 7
      %s219 = smul.addr %s216, 8
      %s220 = sadd.s32 %s218, %s219
      %s221 = smul.addr %s220, 4
      %s222 = scalar_lea.vmem %s0, %s221
      %p223 = pneg %p51
      %p224 = pneg %p48
      %p225 = pneg %p72
      %p226 = pneg %p69
      %p227 = pneg %p93
      %p228 = pneg %p90
      %p229 = pneg %p114
      %p230 = pneg %p111
      %p231 = pneg %p135
      %p232 = pneg %p132
      %p233 = pneg %p163
      %p234 = pneg %p160
      %p235 = scmp.lt.s32.totalorder %s21, 1
      %s236 = scalar_select %p235, %s21, 1
      %p237 = scmp.lt.s32.totalorder %s20, 0
      %s238 = scalar_select %p237, %s20, 0
      %s239 = smul.addr %s236, 4
      %s240 = sadd.s32 %s238, %s239
      %s241 = smul.addr %s240, 8
      %s242 = scalar_lea.vmem %s5, %s241
      %s243 = smul.u32 8, %s20
      %p244 = scmp.lt.s32.totalorder %s21, 1
      %s245 = scalar_select %p244, %s21, 1
      %p246 = scmp.lt.s32.totalorder %s243, 7
      %s247 = scalar_select %p246, %s243, 7
      %s248 = smul.addr %s245, 8
      %s249 = sadd.s32 %s247, %s248
      %s250 = smul.addr %s249, 4
      %s251 = scalar_lea.vmem %s0, %s250
      %s252 = smul.u32 8, %s20
      %p253 = scmp.lt.s32.totalorder %s21, 1
      %s254 = scalar_select %p253, %s21, 1
      %p255 = scmp.lt.s32.totalorder %s20, 0
      %s256 = scalar_select %p255, %s20, 0
      %s257 = smul.addr %s254, 4
      %s258 = sadd.s32 %s256, %s257
      %s259 = smul.addr %s258, 8
      %s260 = scalar_lea.vmem %s5, %s259
      %v262 = vld [vmem:[%s251] sm:$0xff]
      %v263 = vld [vmem:[%s251 + $0x8] sm:$0xff]
      %v264 = vld [vmem:[%s251 + $0x10] sm:$0xff]
      %v265 = vld [vmem:[%s251 + $0x18] sm:$0xff]
      %v266 = vld [vmem:[%s1] sm:$0xf]
      %v267 = vld [vmem:[%s1 + $0x4] sm:$0xf]
      %v268 = vld [vmem:[%s2] sm:$0xff]
      %v269 = vld [vmem:[%s2 + $0x8] sm:$0xff]
      %271 = vset.pattern.permute.xlu0 0
      %272 = vperm.xlu0 %271, %v268
      %v273 = vpop.permute.xlu0 %272
      %276 = vset.pattern.permute.xlu0 0
      %277 = vperm.xlu0 %276, %v269
      %v278 = vpop.permute.xlu0 %277
      %v282 = vunpack.c.l.b16 %v266
      %v283 = vunpack.c.l.b16 %v267
      %v284 = vpack.c.b16 %v283, %v282
      %v289 = vunpack.c.l.b16 %v262
      %v290 = vunpack.c.h.b16 %v262
      %v291 = vunpack.c.l.b16 %v263
      %v292 = vunpack.c.h.b16 %v263
      %v293 = vunpack.c.l.b16 %v264
      %v294 = vunpack.c.h.b16 %v264
      %v295 = vunpack.c.l.b16 %v265
      %v296 = vunpack.c.h.b16 %v265
      %v297 = vpack.c.b16 %v289, %v289
      %v298 = vpack.c.b16 %v290, %v290
      %v299 = vpack.c.b16 %v291, %v291
      %v300 = vpack.c.b16 %v292, %v292
      %v301 = vpack.c.b16 %v293, %v293
      %v302 = vpack.c.b16 %v294, %v294
      %v303 = vpack.c.b16 %v295, %v295
      %v304 = vpack.c.b16 %v296, %v296
      %vm305 = vcmask 56320
      %v307 = vsel %vm305, %v284, 0
      %vm309 = vcmask 1042432
      %vm310 = vcmask 1043456
      %v311 = vsel %vm309, 4294967295, 65535
      %v312 = vsel %vm310, %v311, 0
      %v314 = vand.u32 %v297, %v312
      %v317 = vand.u32 %v298, %v312
      %v320 = vand.u32 %v299, %v312
      %v323 = vand.u32 %v300, %v312
      %v326 = vand.u32 %v301, %v312
      %v329 = vand.u32 %v302, %v312
      %v332 = vand.u32 %v303, %v312
      %v335 = vand.u32 %v304, %v312
      %337 = vmatprep.subr.bf16.mxu0 %v317
      %338 = vmatpush1.bf16.msra.mxu0 %v314
      %339 = vmatprep.subr.bf16.mxu0 0
      %340 = vmatpush1.bf16.msra.mxu0 0
      %341 = vmatprep.subr.bf16.mxu0 0
      %342 = vmatpush1.bf16.msra.mxu0 0
      %343 = vmatprep.subr.bf16.mxu0 0
      %344 = vmatpush1.bf16.msra.mxu0 0
      %345 = vmatprep.subr.bf16.mxu0 0
      %346 = vmatpush1.bf16.msra.mxu0 0
      %347 = vmatprep.subr.bf16.mxu0 0
      %348 = vmatpush1.bf16.msra.mxu0 0
      %349 = vmatprep.subr.bf16.mxu0 0
      %350 = vmatpush1.bf16.msra.mxu0 0
      %351 = vmatprep.subr.bf16.mxu0 0
      %352 = vmatpush1.bf16.msra.mxu0 0
      %353 = vmatprep.subr.bf16.mxu0 0
      %354 = vmatpush1.bf16.msra.mxu0 0
      %355 = vmatprep.subr.bf16.mxu0 0
      %356 = vmatpush1.bf16.msra.mxu0 0
      %357 = vmatprep.subr.bf16.mxu0 0
      %358 = vmatpush1.bf16.msra.mxu0 0
      %359 = vmatprep.subr.bf16.mxu0 0
      %360 = vmatpush1.bf16.msra.mxu0 0
      %361 = vmatprep.subr.bf16.mxu0 0
      %362 = vmatpush1.bf16.msra.mxu0 0
      %363 = vmatprep.subr.bf16.mxu0 0
      %364 = vmatpush1.bf16.msra.mxu0 0
      %365 = vmatprep.subr.bf16.mxu0 0
      %366 = vmatpush1.bf16.msra.mxu0 0
      %367 = vmatprep.subr.bf16.mxu0 0
      %368 = vmatpush1.bf16.msra.mxu0 0
      %369 = vmatprep.mubr.bf16.mxu0 0
      %370 = vmatmul.mubr.bf16.gmra.mrb[0].mxu0 %v307
      %v371 = vpop.f32.mrb[0].mxu0
      %v372 = vadd.f32 %v273, %v371
      %v373 = vpop.f32.mrb[0].mxu0
      %v374 = vadd.f32 %v273, %v373
      %v375 = vpop.f32.mrb[0].mxu0
      %v376 = vadd.f32 %v278, %v375
      %v377 = vpop.f32.mrb[0].mxu0
      %v378 = vadd.f32 %v278, %v377
      %379 = vdwg.mxu0
      %380 = vmatprep.subr.bf16.mxu0 %v323
      %381 = vmatpush1.bf16.msra.mxu0 %v320
      %382 = vmatprep.subr.bf16.mxu0 0
      %383 = vmatpush1.bf16.msra.mxu0 0
      %384 = vmatprep.subr.bf16.mxu0 0
      %385 = vmatpush1.bf16.msra.mxu0 0
      %386 = vmatprep.subr.bf16.mxu0 0
      %387 = vmatpush1.bf16.msra.mxu0 0
      %388 = vmatprep.subr.bf16.mxu0 0
      %389 = vmatpush1.bf16.msra.mxu0 0
      %390 = vmatprep.subr.bf16.mxu0 0
      %391 = vmatpush1.bf16.msra.mxu0 0
      %392 = vmatprep.subr.bf16.mxu0 0
      %393 = vmatpush1.bf16.msra.mxu0 0
      %394 = vmatprep.subr.bf16.mxu0 0
      %395 = vmatpush1.bf16.msra.mxu0 0
      %396 = vmatprep.subr.bf16.mxu0 0
      %397 = vmatpush1.bf16.msra.mxu0 0
      %398 = vmatprep.subr.bf16.mxu0 0
      %399 = vmatpush1.bf16.msra.mxu0 0
      %400 = vmatprep.subr.bf16.mxu0 0
      %401 = vmatpush1.bf16.msra.mxu0 0
      %402 = vmatprep.subr.bf16.mxu0 0
      %403 = vmatpush1.bf16.msra.mxu0 0
      %404 = vmatprep.subr.bf16.mxu0 0
      %405 = vmatpush1.bf16.msra.mxu0 0
      %406 = vmatprep.subr.bf16.mxu0 0
      %407 = vmatpush1.bf16.msra.mxu0 0
      %408 = vmatprep.subr.bf16.mxu0 0
      %409 = vmatpush1.bf16.msra.mxu0 0
      %410 = vmatprep.subr.bf16.mxu0 0
      %411 = vmatpush1.bf16.msra.mxu0 0
      %412 = vmatprep.mubr.bf16.mxu0 0
      %413 = vmatmul.mubr.bf16.gmra.mrb[0].mxu0 %v307
      %v414 = vpop.f32.mrb[0].mxu0
      %v415 = vadd.f32 %v273, %v414
      %v416 = vpop.f32.mrb[0].mxu0
      %v417 = vadd.f32 %v273, %v416
      %v418 = vpop.f32.mrb[0].mxu0
      %v419 = vadd.f32 %v278, %v418
      %v420 = vpop.f32.mrb[0].mxu0
      %v421 = vadd.f32 %v278, %v420
      %422 = vdwg.mxu0
      %423 = vmatprep.subr.bf16.mxu0 %v329
      %424 = vmatpush1.bf16.msra.mxu0 %v326
      %425 = vmatprep.subr.bf16.mxu0 0
      %426 = vmatpush1.bf16.msra.mxu0 0
      %427 = vmatprep.subr.bf16.mxu0 0
      %428 = vmatpush1.bf16.msra.mxu0 0
      %429 = vmatprep.subr.bf16.mxu0 0
      %430 = vmatpush1.bf16.msra.mxu0 0
      %431 = vmatprep.subr.bf16.mxu0 0
      %432 = vmatpush1.bf16.msra.mxu0 0
      %433 = vmatprep.subr.bf16.mxu0 0
      %434 = vmatpush1.bf16.msra.mxu0 0
      %435 = vmatprep.subr.bf16.mxu0 0
      %436 = vmatpush1.bf16.msra.mxu0 0
      %437 = vmatprep.subr.bf16.mxu0 0
      %438 = vmatpush1.bf16.msra.mxu0 0
      %439 = vmatprep.subr.bf16.mxu0 0
      %440 = vmatpush1.bf16.msra.mxu0 0
      %441 = vmatprep.subr.bf16.mxu0 0
      %442 = vmatpush1.bf16.msra.mxu0 0
      %443 = vmatprep.subr.bf16.mxu0 0
      %444 = vmatpush1.bf16.msra.mxu0 0
      %445 = vmatprep.subr.bf16.mxu0 0
      %446 = vmatpush1.bf16.msra.mxu0 0
      %447 = vmatprep.subr.bf16.mxu0 0
      %448 = vmatpush1.bf16.msra.mxu0 0
      %449 = vmatprep.subr.bf16.mxu0 0
      %450 = vmatpush1.bf16.msra.mxu0 0
      %451 = vmatprep.subr.bf16.mxu0 0
      %452 = vmatpush1.bf16.msra.mxu0 0
      %453 = vmatprep.subr.bf16.mxu0 0
      %454 = vmatpush1.bf16.msra.mxu0 0
      %455 = vmatprep.mubr.bf16.mxu0 0
      %456 = vmatmul.mubr.bf16.gmra.mrb[0].mxu0 %v307
      %v457 = vpop.f32.mrb[0].mxu0
      %v458 = vadd.f32 %v273, %v457
      %v459 = vpop.f32.mrb[0].mxu0
      %v460 = vadd.f32 %v273, %v459
      %v461 = vpop.f32.mrb[0].mxu0
      %v462 = vadd.f32 %v278, %v461
      %v463 = vpop.f32.mrb[0].mxu0
      %v464 = vadd.f32 %v278, %v463
      %465 = vdwg.mxu0
      %466 = vmatprep.subr.bf16.mxu0 %v335
      %467 = vmatpush1.bf16.msra.mxu0 %v332
      %468 = vmatprep.subr.bf16.mxu0 0
      %469 = vmatpush1.bf16.msra.mxu0 0
      %470 = vmatprep.subr.bf16.mxu0 0
      %471 = vmatpush1.bf16.msra.mxu0 0
      %472 = vmatprep.subr.bf16.mxu0 0
      %473 = vmatpush1.bf16.msra.mxu0 0
      %474 = vmatprep.subr.bf16.mxu0 0
      %475 = vmatpush1.bf16.msra.mxu0 0
      %476 = vmatprep.subr.bf16.mxu0 0
      %477 = vmatpush1.bf16.msra.mxu0 0
      %478 = vmatprep.subr.bf16.mxu0 0
      %479 = vmatpush1.bf16.msra.mxu0 0
      %480 = vmatprep.subr.bf16.mxu0 0
      %481 = vmatpush1.bf16.msra.mxu0 0
      %482 = vmatprep.subr.bf16.mxu0 0
      %483 = vmatpush1.bf16.msra.mxu0 0
      %484 = vmatprep.subr.bf16.mxu0 0
      %485 = vmatpush1.bf16.msra.mxu0 0
      %486 = vmatprep.subr.bf16.mxu0 0
      %487 = vmatpush1.bf16.msra.mxu0 0
      %488 = vmatprep.subr.bf16.mxu0 0
      %489 = vmatpush1.bf16.msra.mxu0 0
      %490 = vmatprep.subr.bf16.mxu0 0
      %491 = vmatpush1.bf16.msra.mxu0 0
      %492 = vmatprep.subr.bf16.mxu0 0
      %493 = vmatpush1.bf16.msra.mxu0 0
      %494 = vmatprep.subr.bf16.mxu0 0
      %495 = vmatpush1.bf16.msra.mxu0 0
      %496 = vmatprep.subr.bf16.mxu0 0
      %497 = vmatpush1.bf16.msra.mxu0 0
      %498 = vmatprep.mubr.bf16.mxu0 0
      %499 = vmatmul.mubr.bf16.gmra.mrb[0].mxu0 %v307
      %v500 = vpop.f32.mrb[0].mxu0
      %v501 = vadd.f32 %v273, %v500
      %v502 = vpop.f32.mrb[0].mxu0
      %v503 = vadd.f32 %v273, %v502
      %v504 = vpop.f32.mrb[0].mxu0
      %v505 = vadd.f32 %v278, %v504
      %v506 = vpop.f32.mrb[0].mxu0
      %v507 = vadd.f32 %v278, %v506
      %508 = vdwg.mxu0
      %v509 = vmul.f32 %v372, 0.2
      %v510 = vmul.f32 %v374, 0.2
      %v511 = vmul.f32 %v415, 0.2
      %v512 = vmul.f32 %v417, 0.2
      %v513 = vmul.f32 %v458, 0.2
      %v514 = vmul.f32 %v460, 0.2
      %v515 = vmul.f32 %v501, 0.2
      %v516 = vmul.f32 %v503, 0.2
      %v517 = vmul.f32 %v376, 0.2
      %v518 = vmul.f32 %v378, 0.2
      %v519 = vmul.f32 %v419, 0.2
      %v520 = vmul.f32 %v421, 0.2
      %v521 = vmul.f32 %v462, 0.2
      %v522 = vmul.f32 %v464, 0.2
      %v523 = vmul.f32 %v505, 0.2
      %v524 = vmul.f32 %v507, 0.2
      %v525 = vmax.f32 %v372, %v509
      %v526 = vmax.f32 %v374, %v510
      %v527 = vmax.f32 %v415, %v511
      %v528 = vmax.f32 %v417, %v512
      %v529 = vmax.f32 %v458, %v513
      %v530 = vmax.f32 %v460, %v514
      %v531 = vmax.f32 %v501, %v515
      %v532 = vmax.f32 %v503, %v516
      %v533 = vmax.f32 %v376, %v517
      %v534 = vmax.f32 %v378, %v518
      %v535 = vmax.f32 %v419, %v519
      %v536 = vmax.f32 %v421, %v520
      %v537 = vmax.f32 %v462, %v521
      %v538 = vmax.f32 %v464, %v522
      %v539 = vmax.f32 %v505, %v523
      %v540 = vmax.f32 %v507, %v524
      %v541 = vld [vmem:[%s3] sm:$0xf]
      %v542 = vld [vmem:[%s3 + $0x4] sm:$0xf]
      %v543 = vld [vmem:[%s3 + $0x8] sm:$0xf]
      %v544 = vld [vmem:[%s3 + $0xc] sm:$0xf]
      %v545 = vpack.c.bf16 %v533, %v525
      %v546 = vpack.c.bf16 %v534, %v526
      %v547 = vpack.c.bf16 %v535, %v527
      %v548 = vpack.c.bf16 %v536, %v528
      %v549 = vpack.c.bf16 %v537, %v529
      %v550 = vpack.c.bf16 %v538, %v530
      %v551 = vpack.c.bf16 %v539, %v531
      %v552 = vpack.c.bf16 %v540, %v532
      %v557 = vunpack.c.l.b16 %v541
      %v558 = vunpack.c.l.b16 %v542
      %v559 = vunpack.c.l.b16 %v543
      %v560 = vunpack.c.l.b16 %v544
      %v561 = vpack.c.b16 %v558, %v557
      %v562 = vpack.c.b16 %v560, %v559
      %vm563 = vcmask 130048
      %v565 = vsel %vm563, %v561, 0
      %v568 = vsel %vm563, %v562, 0
      %570 = vmatprep.subr.bf16.mxu0 %v546
      %571 = vmatpush1.bf16.msra.mxu0 %v545
      %572 = vmatprep.subr.bf16.mxu0 0
      %573 = vmatpush1.bf16.msra.mxu0 0
      %574 = vmatprep.subr.bf16.mxu0 0
      %575 = vmatpush1.bf16.msra.mxu0 0
      %576 = vmatprep.subr.bf16.mxu0 0
      %577 = vmatpush1.bf16.msra.mxu0 0
      %578 = vmatprep.subr.bf16.mxu0 0
      %579 = vmatpush1.bf16.msra.mxu0 0
      %580 = vmatprep.subr.bf16.mxu0 0
      %581 = vmatpush1.bf16.msra.mxu0 0
      %582 = vmatprep.subr.bf16.mxu0 0
      %583 = vmatpush1.bf16.msra.mxu0 0
      %584 = vmatprep.subr.bf16.mxu0 0
      %585 = vmatpush1.bf16.msra.mxu0 0
      %586 = vmatprep.subr.bf16.mxu0 0
      %587 = vmatpush1.bf16.msra.mxu0 0
      %588 = vmatprep.subr.bf16.mxu0 0
      %589 = vmatpush1.bf16.msra.mxu0 0
      %590 = vmatprep.subr.bf16.mxu0 0
      %591 = vmatpush1.bf16.msra.mxu0 0
      %592 = vmatprep.subr.bf16.mxu0 0
      %593 = vmatpush1.bf16.msra.mxu0 0
      %594 = vmatprep.subr.bf16.mxu0 0
      %595 = vmatpush1.bf16.msra.mxu0 0
      %596 = vmatprep.subr.bf16.mxu0 0
      %597 = vmatpush1.bf16.msra.mxu0 0
      %598 = vmatprep.subr.bf16.mxu0 0
      %599 = vmatpush1.bf16.msra.mxu0 0
      %600 = vmatprep.subr.bf16.mxu0 0
      %601 = vmatpush1.bf16.msra.mxu0 0
      %602 = vmatprep.mubr.bf16.mxu0 0
      %603 = vmatmul.mubr.bf16.gmra.mrb[0].mxu0 %v565
      %v604 = vpop.f32.mrb[0].mxu0
      %v605 = vadd.f32 0.0, %v604
      %v606 = vpop.f32.mrb[0].mxu0
      %v607 = vadd.f32 0.0, %v606
      %v608 = vpop.f32.mrb[0].mxu0
      %v609 = vadd.f32 0.0, %v608
      %v610 = vpop.f32.mrb[0].mxu0
      %v611 = vadd.f32 0.0, %v610
      %612 = vmatprep.mubr.bf16.mxu0 0
      %613 = vmatmul.mubr.bf16.gmra.mrb[0].mxu0 %v568
      %v614 = vpop.f32.mrb[0].mxu0
      %v615 = vadd.f32 0.0, %v614
      %v616 = vpop.f32.mrb[0].mxu0
      %v617 = vadd.f32 0.0, %v616
      %v618 = vpop.f32.mrb[0].mxu0
      %v619 = vadd.f32 0.0, %v618
      %v620 = vpop.f32.mrb[0].mxu0
      %v621 = vadd.f32 0.0, %v620
      %622 = vdwg.mxu0
      %623 = vmatprep.subr.bf16.mxu0 %v548
      %624 = vmatpush1.bf16.msra.mxu0 %v547
      %625 = vmatprep.subr.bf16.mxu0 0
      %626 = vmatpush1.bf16.msra.mxu0 0
      %627 = vmatprep.subr.bf16.mxu0 0
      %628 = vmatpush1.bf16.msra.mxu0 0
      %629 = vmatprep.subr.bf16.mxu0 0
      %630 = vmatpush1.bf16.msra.mxu0 0
      %631 = vmatprep.subr.bf16.mxu0 0
      %632 = vmatpush1.bf16.msra.mxu0 0
      %633 = vmatprep.subr.bf16.mxu0 0
      %634 = vmatpush1.bf16.msra.mxu0 0
      %635 = vmatprep.subr.bf16.mxu0 0
      %636 = vmatpush1.bf16.msra.mxu0 0
      %637 = vmatprep.subr.bf16.mxu0 0
      %638 = vmatpush1.bf16.msra.mxu0 0
      %639 = vmatprep.subr.bf16.mxu0 0
      %640 = vmatpush1.bf16.msra.mxu0 0
      %641 = vmatprep.subr.bf16.mxu0 0
      %642 = vmatpush1.bf16.msra.mxu0 0
      %643 = vmatprep.subr.bf16.mxu0 0
      %644 = vmatpush1.bf16.msra.mxu0 0
      %645 = vmatprep.subr.bf16.mxu0 0
      %646 = vmatpush1.bf16.msra.mxu0 0
      %647 = vmatprep.subr.bf16.mxu0 0
      %648 = vmatpush1.bf16.msra.mxu0 0
      %649 = vmatprep.subr.bf16.mxu0 0
      %650 = vmatpush1.bf16.msra.mxu0 0
      %651 = vmatprep.subr.bf16.mxu0 0
      %652 = vmatpush1.bf16.msra.mxu0 0
      %653 = vmatprep.subr.bf16.mxu0 0
      %654 = vmatpush1.bf16.msra.mxu0 0
      %655 = vmatprep.mubr.bf16.mxu0 0
      %656 = vmatmul.mubr.bf16.gmra.mrb[0].mxu0 %v565
      %v657 = vpop.f32.mrb[0].mxu0
      %v658 = vadd.f32 0.0, %v657
      %v659 = vpop.f32.mrb[0].mxu0
      %v660 = vadd.f32 0.0, %v659
      %v661 = vpop.f32.mrb[0].mxu0
      %v662 = vadd.f32 0.0, %v661
      %v663 = vpop.f32.mrb[0].mxu0
      %v664 = vadd.f32 0.0, %v663
      %665 = vmatprep.mubr.bf16.mxu0 0
      %666 = vmatmul.mubr.bf16.gmra.mrb[0].mxu0 %v568
      %v667 = vpop.f32.mrb[0].mxu0
      %v668 = vadd.f32 0.0, %v667
      %v669 = vpop.f32.mrb[0].mxu0
      %v670 = vadd.f32 0.0, %v669
      %v671 = vpop.f32.mrb[0].mxu0
      %v672 = vadd.f32 0.0, %v671
      %v673 = vpop.f32.mrb[0].mxu0
      %v674 = vadd.f32 0.0, %v673
      %675 = vdwg.mxu0
      %676 = vmatprep.subr.bf16.mxu0 %v550
      %677 = vmatpush1.bf16.msra.mxu0 %v549
      %678 = vmatprep.subr.bf16.mxu0 0
      %679 = vmatpush1.bf16.msra.mxu0 0
      %680 = vmatprep.subr.bf16.mxu0 0
      %681 = vmatpush1.bf16.msra.mxu0 0
      %682 = vmatprep.subr.bf16.mxu0 0
      %683 = vmatpush1.bf16.msra.mxu0 0
      %684 = vmatprep.subr.bf16.mxu0 0
      %685 = vmatpush1.bf16.msra.mxu0 0
      %686 = vmatprep.subr.bf16.mxu0 0
      %687 = vmatpush1.bf16.msra.mxu0 0
      %688 = vmatprep.subr.bf16.mxu0 0
      %689 = vmatpush1.bf16.msra.mxu0 0
      %690 = vmatprep.subr.bf16.mxu0 0
      %691 = vmatpush1.bf16.msra.mxu0 0
      %692 = vmatprep.subr.bf16.mxu0 0
      %693 = vmatpush1.bf16.msra.mxu0 0
      %694 = vmatprep.subr.bf16.mxu0 0
      %695 = vmatpush1.bf16.msra.mxu0 0
      %696 = vmatprep.subr.bf16.mxu0 0
      %697 = vmatpush1.bf16.msra.mxu0 0
      %698 = vmatprep.subr.bf16.mxu0 0
      %699 = vmatpush1.bf16.msra.mxu0 0
      %700 = vmatprep.subr.bf16.mxu0 0
      %701 = vmatpush1.bf16.msra.mxu0 0
      %702 = vmatprep.subr.bf16.mxu0 0
      %703 = vmatpush1.bf16.msra.mxu0 0
      %704 = vmatprep.subr.bf16.mxu0 0
      %705 = vmatpush1.bf16.msra.mxu0 0
      %706 = vmatprep.subr.bf16.mxu0 0
      %707 = vmatpush1.bf16.msra.mxu0 0
      %708 = vmatprep.mubr.bf16.mxu0 0
      %709 = vmatmul.mubr.bf16.gmra.mrb[0].mxu0 %v565
      %v710 = vpop.f32.mrb[0].mxu0
      %v711 = vadd.f32 0.0, %v710
      %v712 = vpop.f32.mrb[0].mxu0
      %v713 = vadd.f32 0.0, %v712
      %v714 = vpop.f32.mrb[0].mxu0
      %v715 = vadd.f32 0.0, %v714
      %v716 = vpop.f32.mrb[0].mxu0
      %v717 = vadd.f32 0.0, %v716
      %718 = vmatprep.mubr.bf16.mxu0 0
      %719 = vmatmul.mubr.bf16.gmra.mrb[0].mxu0 %v568
      %v720 = vpop.f32.mrb[0].mxu0
      %v721 = vadd.f32 0.0, %v720
      %v722 = vpop.f32.mrb[0].mxu0
      %v723 = vadd.f32 0.0, %v722
      %v724 = vpop.f32.mrb[0].mxu0
      %v725 = vadd.f32 0.0, %v724
      %v726 = vpop.f32.mrb[0].mxu0
      %v727 = vadd.f32 0.0, %v726
      %728 = vdwg.mxu0
      %729 = vmatprep.subr.bf16.mxu0 %v552
      %730 = vmatpush1.bf16.msra.mxu0 %v551
      %731 = vmatprep.subr.bf16.mxu0 0
      %732 = vmatpush1.bf16.msra.mxu0 0
      %733 = vmatprep.subr.bf16.mxu0 0
      %734 = vmatpush1.bf16.msra.mxu0 0
      %735 = vmatprep.subr.bf16.mxu0 0
      %736 = vmatpush1.bf16.msra.mxu0 0
      %737 = vmatprep.subr.bf16.mxu0 0
      %738 = vmatpush1.bf16.msra.mxu0 0
      %739 = vmatprep.subr.bf16.mxu0 0
      %740 = vmatpush1.bf16.msra.mxu0 0
      %741 = vmatprep.subr.bf16.mxu0 0
      %742 = vmatpush1.bf16.msra.mxu0 0
      %743 = vmatprep.subr.bf16.mxu0 0
      %744 = vmatpush1.bf16.msra.mxu0 0
      %745 = vmatprep.subr.bf16.mxu0 0
      %746 = vmatpush1.bf16.msra.mxu0 0
      %747 = vmatprep.subr.bf16.mxu0 0
      %748 = vmatpush1.bf16.msra.mxu0 0
      %749 = vmatprep.subr.bf16.mxu0 0
      %750 = vmatpush1.bf16.msra.mxu0 0
      %751 = vmatprep.subr.bf16.mxu0 0
      %752 = vmatpush1.bf16.msra.mxu0 0
      %753 = vmatprep.subr.bf16.mxu0 0
      %754 = vmatpush1.bf16.msra.mxu0 0
      %755 = vmatprep.subr.bf16.mxu0 0
      %756 = vmatpush1.bf16.msra.mxu0 0
      %757 = vmatprep.subr.bf16.mxu0 0
      %758 = vmatpush1.bf16.msra.mxu0 0
      %759 = vmatprep.subr.bf16.mxu0 0
      %760 = vmatpush1.bf16.msra.mxu0 0
      %761 = vmatprep.mubr.bf16.mxu0 0
      %762 = vmatmul.mubr.bf16.gmra.mrb[0].mxu0 %v565
      %v763 = vpop.f32.mrb[0].mxu0
      %v764 = vadd.f32 0.0, %v763
      %v765 = vpop.f32.mrb[0].mxu0
      %v766 = vadd.f32 0.0, %v765
      %v767 = vpop.f32.mrb[0].mxu0
      %v768 = vadd.f32 0.0, %v767
      %v769 = vpop.f32.mrb[0].mxu0
      %v770 = vadd.f32 0.0, %v769
      %771 = vmatprep.mubr.bf16.mxu0 0
      %772 = vmatmul.mubr.bf16.gmra.mrb[0].mxu0 %v568
      %v773 = vpop.f32.mrb[0].mxu0
      %v774 = vadd.f32 0.0, %v773
      %v775 = vpop.f32.mrb[0].mxu0
      %v776 = vadd.f32 0.0, %v775
      %v777 = vpop.f32.mrb[0].mxu0
      %v778 = vadd.f32 0.0, %v777
      %v779 = vpop.f32.mrb[0].mxu0
      %v780 = vadd.f32 0.0, %v779
      %781 = vdwg.mxu0
      %v782 = vmax.f32 %v605, %v607
      %v783 = vmax.f32 %v609, %v611
      %v784 = vmax.f32 %v615, %v617
      %v785 = vmax.f32 %v619, %v621
      %v786 = vmax.f32 %v782, %v658
      %v787 = vmax.f32 %v783, %v662
      %v788 = vmax.f32 %v784, %v668
      %v789 = vmax.f32 %v785, %v672
      %v790 = vmax.f32 %v786, %v660
      %v791 = vmax.f32 %v787, %v664
      %v792 = vmax.f32 %v788, %v670
      %v793 = vmax.f32 %v789, %v674
      %v794 = vmax.f32 %v790, %v711
      %v795 = vmax.f32 %v791, %v715
      %v796 = vmax.f32 %v792, %v721
      %v797 = vmax.f32 %v793, %v725
      %v798 = vmax.f32 %v794, %v713
      %v799 = vmax.f32 %v795, %v717
      %v800 = vmax.f32 %v796, %v723
      %v801 = vmax.f32 %v797, %v727
      %v802 = vmax.f32 %v798, %v764
      %v803 = vmax.f32 %v799, %v768
      %v804 = vmax.f32 %v800, %v774
      %v805 = vmax.f32 %v801, %v778
      %v806 = vmax.f32 %v802, %v766
      %v807 = vmax.f32 %v803, %v770
      %v808 = vmax.f32 %v804, %v776
      %v809 = vmax.f32 %v805, %v780
      %v810 = vld [vmem:[%s4] sm:$0xff]
      %v811 = vld [vmem:[%s4 + $0x8] sm:$0xff]
      %v812 = vld [vmem:[%s4 + $0x10] sm:$0xff]
      %v813 = vld [vmem:[%s4 + $0x18] sm:$0xff]
      %815 = vset.pattern.permute.xlu0 0
      %816 = vperm.xlu0 %815, %v810
      %v817 = vpop.permute.xlu0 %816
      %820 = vset.pattern.permute.xlu0 0
      %821 = vperm.xlu0 %820, %v811
      %v822 = vpop.permute.xlu0 %821
      %825 = vset.pattern.permute.xlu0 0
      %826 = vperm.xlu0 %825, %v812
      %v827 = vpop.permute.xlu0 %826
      %830 = vset.pattern.permute.xlu0 0
      %831 = vperm.xlu0 %830, %v813
      %v832 = vpop.permute.xlu0 %831
      %v834 = vadd.f32 %v806, %v817
      %v835 = vadd.f32 %v807, %v822
      %v836 = vadd.f32 %v808, %v827
      %v837 = vadd.f32 %v809, %v832
      %v838 = vmul.f32 %v834, 0.2
      %v839 = vmul.f32 %v835, 0.2
      %v840 = vmul.f32 %v836, 0.2
      %v841 = vmul.f32 %v837, 0.2
      %v842 = vmax.f32 %v834, %v838
      %v843 = vmax.f32 %v835, %v839
      %v844 = vmax.f32 %v836, %v840
      %v845 = vmax.f32 %v837, %v841
      %846 = vst [vmem:[%s260] sm:$0xff] %v842
      %847 = vst [vmem:[%s260 + $0x8] sm:$0xff] %v843
      %848 = vst [vmem:[%s260 + $0x10] sm:$0xff] %v844
      %849 = vst [vmem:[%s260 + $0x18] sm:$0xff] %v845
      %p850 = scmp.lt.s32.totalorder %s21, 1
      %s851 = scalar_select %p850, %s21, 1
      %p852 = scmp.lt.s32.totalorder %s20, 0
      %s853 = scalar_select %p852, %s20, 0
      %s854 = smul.addr %s851, 4
      %s855 = sadd.s32 %s853, %s854
      %s856 = smul.addr %s855, 8
      %s857 = scalar_lea.vmem %s5, %s856
      // Predicated region
      $region41: #{pointnet_sa_forward.1} parent=39 // pred_check
        %p858 = pneg %p160
      $region42: #{pointnet_sa_forward.1} parent=39 // pred_check_branch
        %860 = sbr.rel (%p858) target = $region44
      $region43: #{pointnet_sa_forward.1} parent=39 // pred_region
        _
      $region44: #{pointnet_sa_forward.1} parent=39 // pred_fallthru
        _
    $region40: #{pointnet_sa_forward.1} parent=5 // pred_fallthru
      _
    %p861 = scmp.le.s32.totalorder 2, %s11
    // Predicated region
    $region45: #{pointnet_sa_forward.1} parent=5 // pred_check
      %p862 = pneg %p861
    $region46: #{pointnet_sa_forward.1} parent=5 // pred_check_branch
      %864 = sbr.rel (%p862) target = $region48
    $region47: #{pointnet_sa_forward.1} parent=5 // pred_region
      %s865 = ssub.s32 %s11, 2
      // Predicated region
      $region49: #{pointnet_sa_forward.1} parent=47 // pred_check
        %p866 = pneg %p166
      $region50: #{pointnet_sa_forward.1} parent=47 // pred_check_branch
        %868 = sbr.rel (%p866) target = $region52
      $region51: #{pointnet_sa_forward.1} parent=47 // pred_region
        %p869 = scmp.lt.s32.totalorder %s23, 1
        %s870 = scalar_select %p869, %s23, 1
        %p871 = scmp.lt.s32.totalorder %s22, 0
        %s872 = scalar_select %p871, %s22, 0
        %s873 = smul.addr %s870, 4
        %s874 = sadd.s32 %s872, %s873
        %s875 = smul.addr %s874, 8
        %s876 = scalar_lea.vmem %s5, %s875
      $region52: #{pointnet_sa_forward.1} parent=47 // pred_fallthru
        _
    $region48: #{pointnet_sa_forward.1} parent=5 // pred_fallthru
      _
  $region6: #{pointnet_sa_forward.1} parent=0 // loop_footer
    %s15 = sadd.s32 1, %s11
  $region7: #{pointnet_sa_forward.1} parent=0 // loop_footer_branch
    %10 = sbr.rel target = $region3
  $region8: #{pointnet_sa_forward.1} parent=0 // loop_exit
    _

</llo_original>
